<compile_context>
chip_gen: v6e
topology: v6e:2x2x1
jax: 0.10.0
libtpu: 0.0.40
codegen_flags: <defaults>
</compile_context>

<pallas_src>
import functools

import jax
import jax.numpy as jnp
from jax.experimental import pallas as pl
from jax.experimental.pallas import tpu as pltpu

_EPS = 1e-6
_TINY_ELEMENTS = 8192      # below this, dispatch overhead dwarfs the work
_MIN_PALLAS_COLS = 128     # lane width: smaller D is better served by fused XLA


def _round_up(x, m):
    return ((x + m - 1) // m) * m


def _vmem_params():
    """(pipeline-buffer byte budget, vmem_limit_bytes), generation-aware."""
    phys = 64 << 20
    try:
        info = pltpu.get_tpu_info()
        v = getattr(info, "vmem_capacity_bytes", None)
        if isinstance(v, int) and v > 0:
            phys = v
    except Exception:
        pass
    if phys >= (100 << 20):      # v5e / v6e: 128 MiB physical VMEM
        budget = 56 << 20
    else:                        # v7x: 64 MiB physical -> keep headroom
        budget = 30 << 20
    return budget, budget + (8 << 20)


def _num_tensorcores():
    """TensorCores addressable by one pallas_call (2 on v7x, else 1).

    Defaulting to 2 is harmless on 1-TC chips: the leading "parallel" grid
    axis simply iterates serially and costs at most one extra skipped step.
    """
    try:
        info = pltpu.get_tpu_info()
        for attr in ("num_cores", "core_count", "num_tensorcores",
                     "tensorcores_per_chip", "cores_per_chip"):
            v = getattr(info, attr, None)
            if isinstance(v, int) and v > 0:
                return max(1, min(v, 2))
    except Exception:
        pass
    return 2


def _choose_tiling(n_rows, n_cols, itemsize, num_cores):
    """Pick the row-block size TN and the vmem limit to compile with."""
    budget, vmem_limit = _vmem_params()
    row_bytes = 2 * n_cols * itemsize        # one row of pred + one row of target
    sub = max(8, 32 // itemsize)             # sublane packing: 8 for f32, 16 for bf16

    # Biggest sublane-aligned TN whose 2-input x 2-pipeline-buffer working set
    # fits the budget.  At these budgets the cap corresponds to >=15 MiB (v7x)
    # / >=28 MiB (v5e/v6e) of combined input per grid step, comfortably above
    # the ~8 MiB needed to amortize the ~0.35 us fixed per-step cost.
    cap = max(sub, (budget // (2 * row_bytes)) // sub * sub)

    rows_per_core = _round_up(pl.cdiv(n_rows, num_cores), sub)
    tn = min(cap, rows_per_core)
    if tn >= n_rows:
        tn = n_rows                          # single block: full-dim block is always legal
    return tn, vmem_limit


def _drt_loss_sum_kernel(pred_ref, target_ref, out_ref, *, n_rows, tn,
                         n_blocks, blocks_per_core, ragged):
    c = pl.program_id(0)                     # TensorCore ("parallel" axis)
    i = pl.program_id(1)                     # this core's row-block ("arbitrary" axis)
    b = c * blocks_per_core + i              # global row-block index (unclamped)

    @pl.when(i == 0)
    def _init():
        out_ref[...] = jnp.zeros_like(out_ref)

    @pl.when(b < n_blocks)                   # skip duplicated (index-clamped) blocks
    def _accumulate():
        p = pred_ref[...].astype(jnp.float32)          # (TN, D)
        t = target_ref[...].astype(jnp.float32)        # (TN, D)

        # Per-row dot product and squared norms (lane-axis reductions).
        dot = jnp.sum(p * t, axis=1, keepdims=True)                # (TN, 1)
        nsq = (jnp.sum(p * p, axis=1, keepdims=True) *
               jnp.sum(t * t, axis=1, keepdims=True))              # (TN, 1)

        # torch CosineSimilarity: dot / max(|p|*|t|, eps)
        #                      == dot * rsqrt(max(|p|^2*|t|^2, eps^2))
        cos = dot * jax.lax.rsqrt(jnp.maximum(nsq, _EPS * _EPS))
        d = 1.0 - cos
        d2 = d * d                                                  # (1 - cos)^2

        if ragged:
            # Only the last real block can hold padded rows: keep the iota /
            # compare / select off the steady-state path.  Keep the select
            # form (NOT mask * d2): padded rows may contain NaN/Inf garbage.
            @pl.when(b != n_blocks - 1)
            def _full():
                out_ref[...] += jnp.sum(d2)

            @pl.when(b == n_blocks - 1)
            def _last():
                row = b * tn + jax.lax.broadcasted_iota(jnp.int32, d2.shape, 0)
                out_ref[...] += jnp.sum(jnp.where(row < n_rows, d2, 0.0))
        else:
            out_ref[...] += jnp.sum(d2)


def _drt_loss_pallas(pred, target, *, block_rows=None, num_cores=None):
    n_rows, n_cols = pred.shape
    itemsize = jnp.dtype(pred.dtype).itemsize

    nc = num_cores if num_cores is not None else _num_tensorcores()
    tn, vmem_limit = _choose_tiling(n_rows, n_cols, itemsize, nc)
    if block_rows is not None:               # test / tuning override
        tn = min(block_rows, n_rows)

    n_blocks = pl.cdiv(n_rows, tn)
    nc = max(1, min(nc, n_blocks))
    bpc = pl.cdiv(n_blocks, nc)              # row-blocks per core
    ragged = (nc * bpc * tn) != n_rows       # any padded / duplicated blocks?

    def in_map(c, i):
        # Clamp so the DMA never targets a fully out-of-range block; the kernel
        # skips the duplicated block via its `b < n_blocks` guard.
        return (jnp.minimum(c * bpc + i, n_blocks - 1), 0)

    in_spec = pl.BlockSpec((tn, n_cols), in_map)
    # TODO(synk): pipeline_mode=pl.Buffered(3) here once verified on the target build.

    partials = pl.pallas_call(
        functools.partial(_drt_loss_sum_kernel, n_rows=n_rows, tn=tn,
                          n_blocks=n_blocks, blocks_per_core=bpc, ragged=ragged),
        out_shape=jax.ShapeDtypeStruct((nc, 8, 128), jnp.float32),
        grid=(nc, bpc),
        in_specs=[in_spec, in_spec],
        out_specs=pl.BlockSpec((1, 8, 128), lambda c, i: (c, 0, 0)),
        compiler_params=pltpu.CompilerParams(
            dimension_semantics=("parallel", "arbitrary"),
            vmem_limit_bytes=vmem_limit,
        ),
    )(pred, target)

    # Per-core partial sums (every element of a core's (8,128) tile holds that
    # core's partial) reduced once here; the mean divide also lives here.
    return jnp.sum(partials[:, 0, 0]) / jnp.float32(n_rows)


def _reference(pred, target):
    """Fused XLA path; also serves tiny and small-D inputs."""
    p = pred.astype(jnp.float32)
    t = target.astype(jnp.float32)
    dot = jnp.sum(p * t, axis=1)
    nrm = jnp.linalg.norm(p, axis=1) * jnp.linalg.norm(t, axis=1)
    cos = dot / jnp.maximum(nrm, _EPS)
    d = 1.0 - cos
    return jnp.mean(d * d)


def get_drt_loss(pred, target):
    """JAX/Pallas equivalent of the PyTorch get_drt_loss.forward."""
    if pred.shape[0] == 0:                   # `if len(pred) > 0` branch (static shape)
        return jnp.float32(0.0)
    n_rows, n_cols = pred.shape
    if n_cols < _MIN_PALLAS_COLS or n_rows * n_cols <= _TINY_ELEMENTS:
        # D << 128 runs at ~D/128 lane efficiency with ~(128/D)x VMEM/DMA-write
        # bloat in the row-tiled kernel; XLA's fused reduction is already at
        # the HBM roofline there.  Tiny problems are dispatch-dominated anyway.
        # TODO(synk): transposed (D, TN) Pallas variant for tiny D if the
        # surrounding graph cannot fuse this fallback.
        return _reference(pred, target)
    return _drt_loss_pallas(pred, target)


if __name__ == "__main__":
    key = jax.random.PRNGKey(0)
    k1, k2, k3, k4, k5, k6 = jax.random.split(key, 6)

    # Case 1: D=128 hidden features, even split across the (parallel) core axis.
    p1 = jax.random.normal(k1, (64, 128), dtype=jnp.float32)
    t1 = jax.random.normal(k2, (64, 128), dtype=jnp.float32)
    o1 = jax.block_until_ready(_drt_loss_pallas(p1, t1))
    r1 = _reference(p1, t1)
    assert jnp.allclose(o1, r1, rtol=1e-5, atol=1e-5), (o1, r1)

    # Case 2: 2-core grid with an odd block count (exercises the clamped index
    # map + skipped overflow block) and a ragged, masked last tile.
    p2 = jax.random.normal(k3, (200, 128), dtype=jnp.float32)
    t2 = jax.random.normal(k4, (200, 128), dtype=jnp.float32)
    o2 = jax.block_until_ready(_drt_loss_pallas(p2, t2, block_rows=80, num_cores=2))
    r2 = _reference(p2, t2)
    assert jnp.allclose(o2, r2, rtol=1e-5, atol=1e-5), (o2, r2)

    # Case 3: bf16 inputs (f32 accumulation in-kernel; 16-row sublane alignment).
    p3 = jax.random.normal(k5, (96, 128), dtype=jnp.float32).astype(jnp.bfloat16)
    t3 = jax.random.normal(k6, (96, 128), dtype=jnp.float32).astype(jnp.bfloat16)
    o3 = jax.block_until_ready(_drt_loss_pallas(p3, t3))
    r3 = _reference(p3, t3)
    assert jnp.allclose(o3, r3, rtol=1e-4, atol=1e-4), (o3, r3)

    # Public wrapper: Pallas path (D >= 128, above the tiny cutoff) ...
    p4 = jax.random.normal(k1, (128, 128), dtype=jnp.float32)
    t4 = jax.random.normal(k2, (128, 128), dtype=jnp.float32)
    o4 = jax.block_until_ready(get_drt_loss(p4, t4))
    r4 = _reference(p4, t4)
    assert jnp.allclose(o4, r4, rtol=1e-5, atol=1e-5), (o4, r4)

    # ... and the small-D (D=3 direction vectors) XLA-routed path.
    p5 = jax.random.normal(k3, (200, 3), dtype=jnp.float32)
    t5 = jax.random.normal(k4, (200, 3), dtype=jnp.float32)
    o5 = jax.block_until_ready(get_drt_loss(p5, t5))
    r5 = _reference(p5, t5)
    assert jnp.allclose(o5, r5, rtol=1e-5, atol=1e-5), (o5, r5)

    print("KERNEL_OK")
</pallas_src>

<mosaic_0001>
module attributes {stable_mosaic.version = 11 : i64} {
  func.func @_drt_loss_sum_kernel(%arg0: i32, %arg1: i32, %arg2: memref<32x128xf32, #tpu.memory_space<vmem>>, %arg3: memref<32x128xf32, #tpu.memory_space<vmem>>, %arg4: memref<1x8x128xf32, #tpu.memory_space<vmem>>) attributes {dimension_semantics = [#tpu.dimension_semantics<parallel>, #tpu.dimension_semantics<arbitrary>], iteration_bounds = array<i64: 2, 1>, scalar_prefetch = 0 : i64, scratch_operands = 0 : i64, tpu.core_type = #tpu.core_type<tc>, window_params = [{transform_indices = @transform_0, window_bounds = array<i64: 32, 128>}, {transform_indices = @transform_1, window_bounds = array<i64: 32, 128>}, {transform_indices = @transform_2, window_bounds = array<i64: 1, 8, 128>}]} {
    %c1_i32 = arith.constant 1 : i32
    %0 = arith.muli %arg0, %c1_i32 : i32
    %1 = arith.addi %0, %arg1 : i32
    %c0_i32 = arith.constant 0 : i32
    %2 = arith.cmpi eq, %arg1, %c0_i32 : i32
    %3 = arith.extui %2 : i1 to i32
    %c0_i32_0 = arith.constant 0 : i32
    %4 = arith.cmpi ne, %3, %c0_i32_0 : i32
    scf.if %4 {
      %cst = arith.constant 0.000000e+00 : f32
      %8 = vector.broadcast %cst : f32 to vector<1x8x128xf32>
      %c0 = arith.constant 0 : index
      %c0_2 = arith.constant 0 : index
      %c0_3 = arith.constant 0 : index
      %9 = vector.load %arg4[%c0, %c0_2, %c0_3] : memref<1x8x128xf32, #tpu.memory_space<vmem>>, vector<1x8x128xf32>
      tpu.vector_store %arg4[%c0, %c0_2, %c0_3], %8 {strides = array<i32>} : memref<1x8x128xf32, #tpu.memory_space<vmem>>, vector<1x8x128xf32>,
    } else {
    }
    %c2_i32 = arith.constant 2 : i32
    %5 = arith.cmpi slt, %1, %c2_i32 : i32
    %6 = arith.extui %5 : i1 to i32
    %c0_i32_1 = arith.constant 0 : i32
    %7 = arith.cmpi ne, %6, %c0_i32_1 : i32
    scf.if %7 {
      %c0 = arith.constant 0 : index
      %c0_2 = arith.constant 0 : index
      %8 = vector.load %arg2[%c0, %c0_2] : memref<32x128xf32, #tpu.memory_space<vmem>>, vector<32x128xf32>
      %c0_3 = arith.constant 0 : index
      %c0_4 = arith.constant 0 : index
      %9 = vector.load %arg3[%c0_3, %c0_4] : memref<32x128xf32, #tpu.memory_space<vmem>>, vector<32x128xf32>
      %10 = arith.mulf %8, %9 : vector<32x128xf32>
      %cst = arith.constant dense<0.000000e+00> : vector<32xf32>
      %11 = vector.multi_reduction <add>, %10, %cst [1] : vector<32x128xf32> to vector<32xf32>
      %12 = vector.shape_cast %11 : vector<32xf32> to vector<32x1xf32>
      %13 = arith.mulf %8, %8 : vector<32x128xf32>
      %cst_5 = arith.constant dense<0.000000e+00> : vector<32xf32>
      %14 = vector.multi_reduction <add>, %13, %cst_5 [1] : vector<32x128xf32> to vector<32xf32>
      %15 = vector.shape_cast %14 : vector<32xf32> to vector<32x1xf32>
      %16 = arith.mulf %9, %9 : vector<32x128xf32>
      %cst_6 = arith.constant dense<0.000000e+00> : vector<32xf32>
      %17 = vector.multi_reduction <add>, %16, %cst_6 [1] : vector<32x128xf32> to vector<32xf32>
      %18 = vector.shape_cast %17 : vector<32xf32> to vector<32x1xf32>
      %19 = arith.mulf %15, %18 : vector<32x1xf32>
      %cst_7 = arith.constant 9.99999996E-13 : f32
      %20 = vector.broadcast %cst_7 : f32 to vector<32x1xf32>
      %21 = arith.maximumf %19, %20 : vector<32x1xf32>
      %22 = math.rsqrt %21 : vector<32x1xf32>
      %23 = arith.mulf %12, %22 : vector<32x1xf32>
      %cst_8 = arith.constant 1.000000e+00 : f32
      %24 = vector.broadcast %cst_8 : f32 to vector<32x1xf32>
      %25 = arith.subf %24, %23 : vector<32x1xf32>
      %26 = arith.mulf %25, %25 : vector<32x1xf32>
      %c0_9 = arith.constant 0 : index
      %c0_10 = arith.constant 0 : index
      %c0_11 = arith.constant 0 : index
      %27 = vector.load %arg4[%c0_9, %c0_10, %c0_11] : memref<1x8x128xf32, #tpu.memory_space<vmem>>, vector<1x8x128xf32>
      %28 = vector.shape_cast %26 : vector<32x1xf32> to vector<1x32x1xf32>
      %cst_12 = arith.constant dense<0.000000e+00> : vector<1xf32>
      %29 = vector.multi_reduction <add>, %28, %cst_12 [1, 2] : vector<1x32x1xf32> to vector<1xf32>
      %30 = vector.shape_cast %29 : vector<1xf32> to vector<1x1x1xf32>
      %31 = vector.extract %30[0, 0, 0] : f32 from vector<1x1x1xf32>
      %32 = vector.broadcast %31 : f32 to vector<1x8x128xf32>
      %33 = arith.addf %27, %32 : vector<1x8x128xf32>
      %c0_13 = arith.constant 0 : index
      %c0_14 = arith.constant 0 : index
      %c0_15 = arith.constant 0 : index
      %34 = vector.load %arg4[%c0_13, %c0_14, %c0_15] : memref<1x8x128xf32, #tpu.memory_space<vmem>>, vector<1x8x128xf32>
      tpu.vector_store %arg4[%c0_13, %c0_14, %c0_15], %33 {strides = array<i32>} : memref<1x8x128xf32, #tpu.memory_space<vmem>>, vector<1x8x128xf32>,
    } else {
    }
    return
  }
  func.func @transform_0(%arg0: i32, %arg1: i32) -> (i32, i32) {
    %c1_i32 = arith.constant 1 : i32
    %0 = arith.muli %arg0, %c1_i32 : i32
    %1 = arith.addi %0, %arg1 : i32
    %c1_i32_0 = arith.constant 1 : i32
    %2 = arith.minsi %1, %c1_i32_0 : i32
    %c0_i32 = arith.constant 0 : i32
    %c0_i32_1 = arith.constant 0 : i32
    return %2, %c0_i32 : i32, i32
  }
  func.func @transform_1(%arg0: i32, %arg1: i32) -> (i32, i32) {
    %c1_i32 = arith.constant 1 : i32
    %0 = arith.muli %arg0, %c1_i32 : i32
    %1 = arith.addi %0, %arg1 : i32
    %c1_i32_0 = arith.constant 1 : i32
    %2 = arith.minsi %1, %c1_i32_0 : i32
    %c0_i32 = arith.constant 0 : i32
    %c0_i32_1 = arith.constant 0 : i32
    return %2, %c0_i32 : i32, i32
  }
  func.func @transform_2(%arg0: i32, %arg1: i32) -> (i32, i32, i32) {
    %c0_i32 = arith.constant 0 : i32
    %c0_i32_0 = arith.constant 0 : i32
    %c0_i32_1 = arith.constant 0 : i32
    return %arg0, %c0_i32, %c0_i32_0 : i32, i32, i32
  }
}

</mosaic_0001>

<llo_original>
// kernel: tpu_custom_call.1
$region0: #{tpu_custom_call.1}
  #allocation0 [shape = 'u32[]', space=smem, size = 0x4, offset = 0x4, fixed_abs, tag = 'smem constant byte address 0x4 - core index']
  #allocation1 [shape = 'u32[144,128]{1,0:T(1,128)}', space=vmem, size = 0x12000, scoped, tag = 'internal scratch']
  %s0 = inlined_call_operand.hbm [shape: f32[64,128], index: 0, kind: input, shape index: {}]
  %s1 = inlined_call_operand.hbm [shape: f32[64,128], index: 1, kind: input, shape index: {}]
  %s2 = inlined_call_operand.hbm [shape: f32[2,8,128], index: 2, kind: output, shape index: {}]
  %s3 = sld [smem:[#allocation0]]
  $region57: #{tpu_custom_call.1} parent=0
    _
  %s5 = ssub.s32 1, %s3
  %s6 = scalar_select 0, %s5, %s3
  $region1: #{tpu_custom_call.1} parent=0
    #allocation2 [shape = 'u8[32768]{0}', space=vmem, size = 0x8000, scoped, tag = 'input window, operand 0']
    #allocation3 [shape = 's32[2]{0}', space=sflag, size = 0x8, scoped, tag = 'scoped memory for tpu_custom_call.1']
    #allocation4 [shape = 's32[2]{0}', space=sflag, size = 0x8, scoped, tag = 'scoped memory for tpu_custom_call.1']
    #allocation5 [shape = 'u8[32768]{0}', space=vmem, size = 0x8000, scoped, tag = 'input window, operand 1']
    #allocation6 [shape = 's32[2]{0}', space=sflag, size = 0x8, scoped, tag = 'scoped memory for tpu_custom_call.1']
    #allocation7 [shape = 'u8[8192]{0}', space=vmem, size = 0x2000, scoped, tag = 'output window, operand 0']
    %7 = vsyncpa [#allocation3], 0
    %s8 = scalar_lea.sflag [#allocation3], 1
    %9 = vsyncpa %s8, 0
    %10 = vsyncpa [#allocation6], 0
    %s11 = scalar_lea.sflag [#allocation6], 1
    %12 = vsyncpa %s11, 0
    %13 = vsyncpa [#allocation4], 0
    %s14 = scalar_lea.sflag [#allocation4], 1
    %15 = vsyncpa %s14, 0
    loop: start=0, step=1, limit=4
    $region2: #{tpu_custom_call.1} parent=1 // loop_pre_header
      _
    $region3: #{tpu_custom_call.1} parent=1 // loop_header
      %s17 = sphi 0, %s21
      %p18 = scmp.ge.s32.totalorder %s17, 4
      %s24 = sphi 0, %s36
      %s25 = sphi 0, %s32
      %s26 = sphi 0, %s24
      %s27 = sphi 0, %s25
      %s28 = sphi 0, %s26
      %s29 = sphi 0, %s27
      %s45 = sphi 0, %s47
      %s48 = sphi 0, %s45
      %s49 = sphi 0, %s48
      %s65 = sphi 0, %s49
      %s77 = sphi 0, %s79
      %s80 = sphi 0, %s77
      %s81 = sphi 0, %s80
      %s97 = sphi 0, %s81
      %s103 = sphi 0, %s105
      %s106 = sphi 0, %s103
      %s107 = sphi 0, %s106
      %s123 = sphi 0, %s107
    $region4: #{tpu_custom_call.1} parent=1 // loop_header_branch
      %20 = sbr.rel (%p18) target = $region8
    $region5: #{tpu_custom_call.1} parent=1 // loop_body
      %s22 = ssub.s32 %s17, 1
      %s23 = ssub.s32 %s17, 2
      %s30 = sadd.s32 1, %s25
      %p31 = scmp.ge.s32.totalorder %s30, 1
      %s32 = scalar_select %p31, 0, %s30
      %s33 = sadd.s32 1, %s24
      %s34 = scalar_select %p31, %s33, %s24
      %p35 = scmp.ge.s32.totalorder %s34, 2
      %s36 = scalar_select %p35, 0, %s34
      %s37 = sadd.s32 %s24, %s25
      %p38 = scmp.lt.s32.totalorder %s37, 1
      %s39 = scalar_select %p38, %s37, 1
      %s40 = sadd.s32 %s36, %s32
      %p41 = scmp.lt.s32.totalorder %s40, 1
      %s42 = scalar_select %p41, %s40, 1
      %s43 = ssub.s32 %s39, %s42
      %p44 = scmp.eq.s32.totalorder %s43, 0
      %s46 = sadd.s32 %s45, 1
      %s47 = scalar_select %p44, %s45, %s46
      %p50 = pneg %p44
      %p51 = scmp.eq.s32.totalorder %s17, 1
      %p52 = por %p50, %p51
      %p53 = scmp.ne.s32.totalorder %s45, %s48
      %p54 = scmp.eq.s32.totalorder %s17, 0
      %p55 = por %p53, %p54
      %p56 = scmp.ne.s32.totalorder %s45, %s48
      %p57 = scmp.eq.s32.totalorder %s22, 1
      %p58 = por %p56, %p57
      %p59 = scmp.ne.s32.totalorder %s48, %s49
      %p60 = scmp.eq.s32.totalorder %s22, 0
      %p61 = por %p59, %p60
      %p62 = scmp.ne.s32.totalorder %s48, %s49
      %p63 = scmp.eq.s32.totalorder %s23, 1
      %p64 = por %p62, %p63
      %p66 = scmp.ne.s32.totalorder %s49, %s65
      %p67 = scmp.eq.s32.totalorder %s23, 0
      %p68 = por %p66, %p67
      %s69 = sadd.s32 %s24, %s25
      %p70 = scmp.lt.s32.totalorder %s69, 1
      %s71 = scalar_select %p70, %s69, 1
      %s72 = sadd.s32 %s36, %s32
      %p73 = scmp.lt.s32.totalorder %s72, 1
      %s74 = scalar_select %p73, %s72, 1
      %s75 = ssub.s32 %s71, %s74
      %p76 = scmp.eq.s32.totalorder %s75, 0
      %s78 = sadd.s32 %s77, 1
      %s79 = scalar_select %p76, %s77, %s78
      %p82 = pneg %p76
      %p83 = scmp.eq.s32.totalorder %s17, 1
      %p84 = por %p82, %p83
      %p85 = scmp.ne.s32.totalorder %s77, %s80
      %p86 = scmp.eq.s32.totalorder %s17, 0
      %p87 = por %p85, %p86
      %p88 = scmp.ne.s32.totalorder %s77, %s80
      %p89 = scmp.eq.s32.totalorder %s22, 1
      %p90 = por %p88, %p89
      %p91 = scmp.ne.s32.totalorder %s80, %s81
      %p92 = scmp.eq.s32.totalorder %s22, 0
      %p93 = por %p91, %p92
      %p94 = scmp.ne.s32.totalorder %s80, %s81
      %p95 = scmp.eq.s32.totalorder %s23, 1
      %p96 = por %p94, %p95
      %p98 = scmp.ne.s32.totalorder %s81, %s97
      %p99 = scmp.eq.s32.totalorder %s23, 0
      %p100 = por %p98, %p99
      %s101 = ssub.s32 %s24, %s36
      %p102 = scmp.eq.s32.totalorder %s101, 0
      %s104 = sadd.s32 %s103, 1
      %s105 = scalar_select %p102, %s103, %s104
      %p108 = pneg %p102
      %p109 = scmp.eq.s32.totalorder %s17, 1
      %p110 = por %p108, %p109
      %p111 = scmp.ne.s32.totalorder %s103, %s106
      %p112 = scmp.eq.s32.totalorder %s17, 0
      %p113 = por %p111, %p112
      %p114 = scmp.ne.s32.totalorder %s103, %s106
      %p115 = scmp.eq.s32.totalorder %s22, 1
      %p116 = por %p114, %p115
      %p117 = scmp.ne.s32.totalorder %s106, %s107
      %p118 = scmp.eq.s32.totalorder %s22, 0
      %p119 = por %p117, %p118
      %p120 = scmp.ne.s32.totalorder %s106, %s107
      %p121 = scmp.eq.s32.totalorder %s23, 1
      %p122 = por %p120, %p121
      %p124 = scmp.ne.s32.totalorder %s107, %s123
      %p125 = scmp.eq.s32.totalorder %s23, 0
      %p126 = por %p124, %p125
      %p127 = scmp.le.s32.totalorder 1, %s17
      %p128 = scmp.lt.s32.totalorder %s17, 3
      %p129 = pnand %p127, %p128
      %p130 = pneg %p129
      // Predicated region
      $region9: #{tpu_custom_call.1} parent=5 // pred_check
        _
      $region10: #{tpu_custom_call.1} parent=5 // pred_check_branch
        %132 = sbr.rel (%p129) target = $region12
      $region11: #{tpu_custom_call.1} parent=5 // pred_region
        %s133 = ssub.s32 %s17, 1
      $region12: #{tpu_custom_call.1} parent=5 // pred_fallthru
        _
      %p134 = scmp.lt.s32.totalorder %s17, 2
      // Predicated region
      $region13: #{tpu_custom_call.1} parent=5 // pred_check
        %p135 = pneg %p134
      $region14: #{tpu_custom_call.1} parent=5 // pred_check_branch
        %137 = sbr.rel (%p135) target = $region16
      $region15: #{tpu_custom_call.1} parent=5 // pred_region
        // Predicated region
        $region17: #{tpu_custom_call.1} parent=15 // pred_check
          %p138 = pneg %p55
        $region18: #{tpu_custom_call.1} parent=15 // pred_check_branch
          %140 = sbr.rel (%p138) target = $region20
        $region19: #{tpu_custom_call.1} parent=15 // pred_region
          %s141 = sand.u32 %s45, 1
          %s142 = scalar_lea.sflag [#allocation3], %s141
          %s143 = sand.u32 %s45, 1
          %s144 = smul.addr %s143, 32
          %s145 = scalar_lea.vmem [#allocation2], %s144
          %s146 = sadd.s32 %s24, %s25
          %p147 = scmp.lt.s32.totalorder %s146, 1
          %s148 = scalar_select %p147, %s146, 1
          %s149 = smul.u32 4, %s148
          %s151 = ssub.s32 512, 512
          %152 = vsyncadd %s142, %s151
          %s153 = smul.addr %s149, 128
          %s154 = scalar_lea.hbm %s0, %s153
          %s155 = sshll.u32 %s145, 4
          %s156 = int_to_ptr.vmem [resolvable:$true] %s155
          %161 = dma.hbm_to_vmem [thread:$0]  %s154, 512, %s156, %s142, 128, 128, 8
        $region20: #{tpu_custom_call.1} parent=15 // pred_fallthru
          _
        // Predicated region
        $region21: #{tpu_custom_call.1} parent=15 // pred_check
          %p162 = pneg %p87
        $region22: #{tpu_custom_call.1} parent=15 // pred_check_branch
          %164 = sbr.rel (%p162) target = $region24
        $region23: #{tpu_custom_call.1} parent=15 // pred_region
          %s165 = sand.u32 %s77, 1
          %s166 = scalar_lea.sflag [#allocation6], %s165
          %s167 = sand.u32 %s77, 1
          %s168 = smul.addr %s167, 32
          %s169 = scalar_lea.vmem [#allocation5], %s168
          %s170 = sadd.s32 %s24, %s25
          %p171 = scmp.lt.s32.totalorder %s170, 1
          %s172 = scalar_select %p171, %s170, 1
          %s173 = smul.u32 4, %s172
          %s175 = ssub.s32 512, 512
          %176 = vsyncadd %s166, %s175
          %s177 = smul.addr %s173, 128
          %s178 = scalar_lea.hbm %s1, %s177
          %s179 = sshll.u32 %s169, 4
          %s180 = int_to_ptr.vmem [resolvable:$true] %s179
          %185 = dma.hbm_to_vmem [thread:$0]  %s178, 512, %s180, %s166, 128, 128, 8
        $region24: #{tpu_custom_call.1} parent=15 // pred_fallthru
          _
      $region16: #{tpu_custom_call.1} parent=5 // pred_fallthru
        _
      %p186 = scmp.le.s32.totalorder 1, %s17
      %p187 = scmp.lt.s32.totalorder %s17, 3
      %p188 = pnand %p186, %p187
      %p189 = pneg %p188
      // Predicated region
      $region25: #{tpu_custom_call.1} parent=5 // pred_check
        _
      $region26: #{tpu_custom_call.1} parent=5 // pred_check_branch
        %191 = sbr.rel (%p188) target = $region28
      $region27: #{tpu_custom_call.1} parent=5 // pred_region
        %s192 = ssub.s32 %s17, 1
        %s193 = sand.u32 %s48, 1
        %s194 = scalar_lea.sflag [#allocation3], %s193
        %s195 = sand.u32 %s48, 1
        %s196 = smul.addr %s195, 32
        %s197 = scalar_lea.vmem [#allocation2], %s196
        // Predicated region
        $region29: #{tpu_custom_call.1} parent=27 // pred_check
          %p198 = pneg %p61
        $region30: #{tpu_custom_call.1} parent=27 // pred_check_branch
          %200 = sbr.rel (%p198) target = $region32
        $region31: #{tpu_custom_call.1} parent=27 // pred_region
          %201 = dma.done %s194, 512
        $region32: #{tpu_custom_call.1} parent=27 // pred_fallthru
          _
        %s202 = sand.u32 %s80, 1
        %s203 = scalar_lea.sflag [#allocation6], %s202
        %s204 = sand.u32 %s80, 1
        %s205 = smul.addr %s204, 32
        %s206 = scalar_lea.vmem [#allocation5], %s205
        // Predicated region
        $region33: #{tpu_custom_call.1} parent=27 // pred_check
          %p207 = pneg %p93
        $region34: #{tpu_custom_call.1} parent=27 // pred_check_branch
          %209 = sbr.rel (%p207) target = $region36
        $region35: #{tpu_custom_call.1} parent=27 // pred_region
          %210 = dma.done %s203, 512
        $region36: #{tpu_custom_call.1} parent=27 // pred_fallthru
          _
        %s211 = sand.u32 %s48, 1
        %s212 = scalar_lea.sflag [#allocation3], %s211
        %s213 = sand.u32 %s48, 1
        %s214 = smul.addr %s213, 32
        %s215 = scalar_lea.vmem [#allocation2], %s214
        %p216 = pneg %p61
        %p217 = pneg %p58
        %s218 = sand.u32 %s80, 1
        %s219 = scalar_lea.sflag [#allocation6], %s218
        %s220 = sand.u32 %s80, 1
        %s221 = smul.addr %s220, 32
        %s222 = scalar_lea.vmem [#allocation5], %s221
        %p223 = pneg %p93
        %p224 = pneg %p90
        %p225 = pneg %p119
        %p226 = pneg %p116
        %s227 = sand.u32 %s106, 1
        %s228 = scalar_lea.sflag [#allocation4], %s227
        %s229 = sand.u32 %s106, 1
        %s230 = smul.addr %s229, 8
        %s231 = scalar_lea.vmem [#allocation7], %s230
        %s232 = sadd.s32 %s26, %s27
        %p233 = scmp.lt.s32.totalorder %s232, 1
        %s234 = scalar_select %p233, %s232, 1
        %s235 = smul.u32 4, %s234
        %s236 = sadd.s32 %s26, %s27
        %p237 = scmp.lt.s32.totalorder %s236, 1
        %s238 = scalar_select %p237, %s236, 1
        %s239 = smul.u32 4, %s238
        %s240 = sadd.s32 %s26, %s27
        %p241 = scmp.eq.s32.totalorder %s27, 0
        // Predicated region
        $region37: #{tpu_custom_call.1} parent=27 // pred_check
          %p242 = pneg %p241
        $region38: #{tpu_custom_call.1} parent=27 // pred_check_branch
          %244 = sbr.rel (%p242) target = $region40
        $region39: #{tpu_custom_call.1} parent=27 // pred_region
          %245 = vst [vmem:[%s231] sm:$0xff] 0.0
        $region40: #{tpu_custom_call.1} parent=27 // pred_fallthru
          _
        %p246 = scmp.lt.s32.totalorder %s240, 2
        // Predicated region
        $region41: #{tpu_custom_call.1} parent=27 // pred_check
          %p247 = pneg %p246
        $region42: #{tpu_custom_call.1} parent=27 // pred_check_branch
          %249 = sbr.rel (%p247) target = $region44
        $region43: #{tpu_custom_call.1} parent=27 // pred_region
          %v250 = vld [vmem:[%s197] sm:$0xff]
          %v251 = vld [vmem:[%s197 + $0x8] sm:$0xff]
          %v252 = vld [vmem:[%s197 + $0x10] sm:$0xff]
          %v253 = vld [vmem:[%s197 + $0x18] sm:$0xff]
          %v254 = vld [vmem:[%s206] sm:$0xff]
          %v255 = vld [vmem:[%s206 + $0x8] sm:$0xff]
          %v256 = vld [vmem:[%s206 + $0x10] sm:$0xff]
          %v257 = vld [vmem:[%s206 + $0x18] sm:$0xff]
          %v258 = vmul.f32 %v250, %v254
          %v259 = vmul.f32 %v251, %v255
          %v260 = vmul.f32 %v252, %v256
          %v261 = vmul.f32 %v253, %v257
          %262 = vadd.xlane.f32.xlu0 %v258
          %v263 = vpop.xlane.xlu0 %262
          %264 = vadd.xlane.f32.xlu0 %v259
          %v265 = vpop.xlane.xlu0 %264
          %266 = vadd.xlane.f32.xlu0 %v260
          %v267 = vpop.xlane.xlu0 %266
          %268 = vadd.xlane.f32.xlu0 %v261
          %v269 = vpop.xlane.xlu0 %268
          %v270 = vmul.f32 %v250, %v250
          %v271 = vmul.f32 %v251, %v251
          %v272 = vmul.f32 %v252, %v252
          %v273 = vmul.f32 %v253, %v253
          %274 = vadd.xlane.f32.xlu0 %v270
          %v275 = vpop.xlane.xlu0 %274
          %276 = vadd.xlane.f32.xlu0 %v271
          %v277 = vpop.xlane.xlu0 %276
          %278 = vadd.xlane.f32.xlu0 %v272
          %v279 = vpop.xlane.xlu0 %278
          %280 = vadd.xlane.f32.xlu0 %v273
          %v281 = vpop.xlane.xlu0 %280
          %v282 = vmul.f32 %v254, %v254
          %v283 = vmul.f32 %v255, %v255
          %v284 = vmul.f32 %v256, %v256
          %v285 = vmul.f32 %v257, %v257
          %286 = vadd.xlane.f32.xlu0 %v282
          %v287 = vpop.xlane.xlu0 %286
          %288 = vadd.xlane.f32.xlu0 %v283
          %v289 = vpop.xlane.xlu0 %288
          %290 = vadd.xlane.f32.xlu0 %v284
          %v291 = vpop.xlane.xlu0 %290
          %292 = vadd.xlane.f32.xlu0 %v285
          %v293 = vpop.xlane.xlu0 %292
          %v294 = vmul.f32 %v275, %v287
          %v295 = vmul.f32 %v277, %v289
          %v296 = vmul.f32 %v279, %v291
          %v297 = vmul.f32 %v281, %v293
          %v298 = vmax.f32 %v294, 1e-12
          %v299 = vmax.f32 %v295, 1e-12
          %v300 = vmax.f32 %v296, 1e-12
          %v301 = vmax.f32 %v297, 1e-12
          %v302 = vrsqrt.pop %v298
          %v303 = vrsqrt.pop %v299
          %v304 = vrsqrt.pop %v300
          %v305 = vrsqrt.pop %v301
          %v306 = vmul.f32 %v263, %v302
          %v307 = vmul.f32 %v265, %v303
          %v308 = vmul.f32 %v267, %v304
          %v309 = vmul.f32 %v269, %v305
          %v310 = vsub.f32 1.0, %v306
          %v311 = vsub.f32 1.0, %v307
          %v312 = vsub.f32 1.0, %v308
          %v313 = vsub.f32 1.0, %v309
          %v314 = vmul.f32 %v310, %v310
          %v315 = vmul.f32 %v311, %v311
          %v316 = vmul.f32 %v312, %v312
          %v317 = vmul.f32 %v313, %v313
          %v318 = vld [vmem:[%s231] sm:$0xff]
          %vm319 = vcmask 7168
          %v320 = vsel %vm319, %v314, 0.0
          %v321 = vsel %vm319, %v315, 0.0
          %v322 = vadd.f32 %v320, %v321
          %v323 = vsel %vm319, %v316, 0.0
          %v324 = vadd.f32 %v322, %v323
          %v325 = vsel %vm319, %v317, 0.0
          %v326 = vadd.f32 %v324, %v325
          %327 = vadd.xlane.f32.xlu0 %v326
          %v328 = vpop.xlane.xlu0 %327
          %v329 = vrot.slane %v328, 4
          %v330 = vadd.f32 %v328, %v329
          %v331 = vrot.slane %v330, 2
          %v332 = vadd.f32 %v330, %v331
          %v333 = vrot.slane %v332, 1
          %v334 = vadd.f32 %v332, %v333
          %s335 = vtos %v334
          %v336 = vstv %s335
          %v337 = vadd.f32 %v318, %v336
          %338 = vst [vmem:[%s231] sm:$0xff] %v337
        $region44: #{tpu_custom_call.1} parent=27 // pred_fallthru
          _
        %s339 = sand.u32 %s106, 1
        %s340 = scalar_lea.sflag [#allocation4], %s339
        %s341 = sand.u32 %s106, 1
        %s342 = smul.addr %s341, 8
        %s343 = scalar_lea.vmem [#allocation7], %s342
        // Predicated region
        $region45: #{tpu_custom_call.1} parent=27 // pred_check
          %p344 = pneg %p116
        $region46: #{tpu_custom_call.1} parent=27 // pred_check_branch
          %346 = sbr.rel (%p344) target = $region48
        $region47: #{tpu_custom_call.1} parent=27 // pred_region
          %s348 = ssub.s32 128, 128
          %349 = vsyncadd %s340, %s348
          %s350 = smul.addr %s26, 128
          %s351 = scalar_lea.hbm %s2, %s350
          %s353 = sshll.u32 %s343, 4
          %s354 = int_to_ptr.vmem [resolvable:$true] %s353
          %356 = dma.vmem_to_hbm [thread:$0]  %s354, 128, %s351, %s340
        $region48: #{tpu_custom_call.1} parent=27 // pred_fallthru
          _
      $region28: #{tpu_custom_call.1} parent=5 // pred_fallthru
        _
      %p357 = scmp.le.s32.totalorder 2, %s17
      // Predicated region
      $region49: #{tpu_custom_call.1} parent=5 // pred_check
        %p358 = pneg %p357
      $region50: #{tpu_custom_call.1} parent=5 // pred_check_branch
        %360 = sbr.rel (%p358) target = $region52
      $region51: #{tpu_custom_call.1} parent=5 // pred_region
        %s361 = ssub.s32 %s17, 2
        // Predicated region
        $region53: #{tpu_custom_call.1} parent=51 // pred_check
          %p362 = pneg %p122
        $region54: #{tpu_custom_call.1} parent=51 // pred_check_branch
          %364 = sbr.rel (%p362) target = $region56
        $region55: #{tpu_custom_call.1} parent=51 // pred_region
          %s365 = sand.u32 %s107, 1
          %s366 = scalar_lea.sflag [#allocation4], %s365
          %s367 = sand.u32 %s107, 1
          %s368 = smul.addr %s367, 8
          %s369 = scalar_lea.vmem [#allocation7], %s368
          %370 = dma.done %s366, 128
        $region56: #{tpu_custom_call.1} parent=51 // pred_fallthru
          _
      $region52: #{tpu_custom_call.1} parent=5 // pred_fallthru
        _
    $region6: #{tpu_custom_call.1} parent=1 // loop_footer
      %s21 = sadd.s32 1, %s17
    $region7: #{tpu_custom_call.1} parent=1 // loop_footer_branch
      %16 = sbr.rel target = $region3
    $region8: #{tpu_custom_call.1} parent=1 // loop_exit
      _
    %371 = vsyncpa [#allocation3], 1
    %s372 = scalar_lea.sflag [#allocation3], 1
    %373 = vsyncpa %s372, 1
    %374 = vsyncpa [#allocation6], 1
    %s375 = scalar_lea.sflag [#allocation6], 1
    %376 = vsyncpa %s375, 1
    %377 = vsyncpa [#allocation4], 1
    %s378 = scalar_lea.sflag [#allocation4], 1
    %379 = vsyncpa %s378, 1

</llo_original>
